<compile_context>
chip_gen: v6e
topology: v6e:2x2x1
jax: 0.10.0
libtpu: 0.0.40
codegen_flags: <defaults>
</compile_context>

<pallas_src>
import math
import numpy as np
import jax
import jax.numpy as jnp
from jax.experimental import pallas as pl
from jax.experimental.pallas import tpu as pltpu

# ----------------------------- config (from the module) ----------------------
N_LEVELS = 16
N_FEAT = 2
LOG2_HASHMAP = 19
HASHMAP_SIZE = 1 << LOG2_HASHMAP
BASE_RES = 16
PER_LEVEL_SCALE = 1.3819
ENC_DIM = N_LEVELS * N_FEAT            # 32 = MLP input dim

HIDDEN = 64                            # n_neurons
OUT_DIM = 1                            # n_output_dims
N_CORNERS = 8                          # 2^3 cell corners

TM = 512                               # points per grid step (lane tile, mult of 128)

# ----------------------------- hash-grid metadata ----------------------------
def _level_meta():
    metas = []
    for lvl in range(N_LEVELS):
        scale = BASE_RES * (PER_LEVEL_SCALE ** lvl) - 1.0
        res = int(math.ceil(scale)) + 1
        dense_size = res ** 3
        params = min(dense_size, HASHMAP_SIZE)
        params = ((params + 7) // 8) * 8          # tcnn pads to multiple of 8
        use_hash = dense_size > params
        metas.append((scale, res, params, use_hash))
    return metas

LEVEL_META = _level_meta()
TABLE_OFFSETS = np.cumsum([0] + [m[2] for m in LEVEL_META]).astype(np.int64)
TOTAL_PARAMS = int(TABLE_OFFSETS[-1])
_PRIMES = np.array([1, 2654435761, 805459861], dtype=np.uint32)


def hash_encode(x01, table):
    """tcnn-style multiresolution hash encoding with the trilinear interpolation
    (corner reduce) fused in JAX.  x01: (N, 3) in [0, 1].  Returns enc (N, 32)
    f32, channel order = 2*level + feature (matches tcnn)."""
    n = x01.shape[0]
    per_level = []
    for lvl, (scale, res, params, use_hash) in enumerate(LEVEL_META):
        pos = x01 * jnp.float32(scale) + 0.5
        pos_grid_f = jnp.floor(pos)
        frac = pos - pos_grid_f                       # (N, 3)
        pos_grid = pos_grid_f.astype(jnp.uint32)
        acc = jnp.zeros((n, N_FEAT), jnp.float32)
        for c in range(N_CORNERS):
            bits = np.array([(c >> d) & 1 for d in range(3)], dtype=np.uint32)
            corner = pos_grid + jnp.asarray(bits)[None, :]        # (N, 3) u32
            if use_hash:
                idx = (corner[:, 0] * jnp.uint32(_PRIMES[0])
                       ^ corner[:, 1] * jnp.uint32(_PRIMES[1])
                       ^ corner[:, 2] * jnp.uint32(_PRIMES[2]))
            else:
                idx = (corner[:, 0]
                       + corner[:, 1] * jnp.uint32(res)
                       + corner[:, 2] * jnp.uint32(res * res))
            idx = (idx % jnp.uint32(params)).astype(jnp.int32)
            w = jnp.prod(
                jnp.where(jnp.asarray(bits)[None, :] == 1, frac, 1.0 - frac),
                axis=1)                                           # (N,)
            acc = acc + table[int(TABLE_OFFSETS[lvl]) + idx] * w[:, None]
        per_level.append(acc)                          # (N, 2)
    return jnp.concatenate(per_level, axis=-1)         # (N, 32) f32


# ----------------------------- Pallas kernel ---------------------------------
def sdf_mlp_kernel(enc_ref, w1_ref, w2_ref, w3_ref, o_ref):
    # enc_ref (32, TM) bf16 | w1_ref (64, 32) bf16 | w2_ref (64, 64) f32
    # w3_ref (64, 1) f32    | o_ref (1, TM) f32.  Points live on the lane axis.
    # layer 1: native bf16 MXU matmul, f32 accumulation
    h = jnp.dot(w1_ref[...], enc_ref[...],
                preferred_element_type=jnp.float32)            # (64, TM) f32
    h = jnp.maximum(h, 0.0)
    # layer 2: f32 matmul (weights tiny; kernel is DMA/overhead bound anyway)
    h = jnp.dot(w2_ref[...], h, preferred_element_type=jnp.float32)
    h = jnp.maximum(h, 0.0)
    # layer 3 (64 -> 1): lane-broadcast multiply + cross-sublane reduce,
    # written as a lane-dense (1, TM) row -> unmasked full-lane stores.
    o_ref[...] = jnp.sum(h * w3_ref[...], axis=0, keepdims=True)


def sdf_forward_pallas(enc, w1, w2, w3, *, tm=TM):
    """Fused FullyFusedMLP (32 -> 64 -> 64 -> 1, ReLU, no output act, no bias)."""
    n = enc.shape[0]
    n_pad = ((n + tm - 1) // tm) * tm
    grid = n_pad // tm

    # bf16 + transposed (lane-dense) boundary layout; XLA fuses this with the
    # hash-encode producer, so it is a single strided write, not an extra pass.
    enc_t = jnp.pad(enc, ((0, n_pad - n), (0, 0))).astype(jnp.bfloat16).T  # (32, n_pad)
    w1_t = w1.T.astype(jnp.bfloat16)        # (64, 32) bf16 (bf16 MXU with enc)
    w2_t = w2.T.astype(jnp.float32)         # (64, 64) f32
    w3_c = w3.astype(jnp.float32)           # (64, 1)  f32

    flops = 2 * n_pad * (ENC_DIM * HIDDEN + HIDDEN * HIDDEN + HIDDEN * OUT_DIM)
    bytes_accessed = (enc_t.size * 2 + w1_t.size * 2 + w2_t.size * 4
                      + w3_c.size * 4 + n_pad * OUT_DIM * 4)

    out = pl.pallas_call(
        sdf_mlp_kernel,
        out_shape=jax.ShapeDtypeStruct((1, n_pad), jnp.float32),
        grid_spec=pltpu.PrefetchScalarGridSpec(
            num_scalar_prefetch=0,
            grid=(grid,),
            in_specs=[
                pl.BlockSpec((ENC_DIM, tm), lambda i: (0, i)),      # lane-dense points
                pl.BlockSpec((HIDDEN, ENC_DIM), lambda i: (0, 0)),  # fetched once
                pl.BlockSpec((HIDDEN, HIDDEN), lambda i: (0, 0)),
                pl.BlockSpec((HIDDEN, OUT_DIM), lambda i: (0, 0)),
            ],
            out_specs=pl.BlockSpec((1, tm), lambda i: (0, i)),
        ),
        compiler_params=pltpu.CompilerParams(
            dimension_semantics=("parallel",)),
        cost_estimate=pl.CostEstimate(flops=flops, transcendentals=0,
                                      bytes_accessed=bytes_accessed),
    )(enc_t, w1_t, w2_t, w3_c)
    return out[0, :n].reshape(n, OUT_DIM)


# ----------------------------- full forward ----------------------------------
def sdf_network_forward(x, table, w1, w2, w3):
    x01 = (x + 1.0) / 2.0                       # module's (x + 1) / 2
    enc = hash_encode(x01, table)               # HashGrid encoding (JAX gather)
    return sdf_forward_pallas(enc, w1, w2, w3)  # fused MLP (Pallas)


if __name__ == "__main__":
    key = jax.random.PRNGKey(0)
    k1, k2, k3, k4, k5 = jax.random.split(key, 5)

    N = 1000                                    # pads to 1024 -> 2 grid steps
    x = jax.random.uniform(k1, (N, 3), jnp.float32, minval=-1.0, maxval=1.0)

    # deterministic synthetic parameters (hash table scaled up from tcnn's
    # +-1e-4 init so the numerical check below is meaningful)
    table = jax.random.uniform(k2, (TOTAL_PARAMS, N_FEAT), jnp.float32,
                               minval=-0.1, maxval=0.1)
    w1 = jax.random.normal(k3, (ENC_DIM, HIDDEN), jnp.float32) / math.sqrt(ENC_DIM)
    w2 = jax.random.normal(k4, (HIDDEN, HIDDEN), jnp.float32) / math.sqrt(HIDDEN)
    w3 = jax.random.normal(k5, (HIDDEN, OUT_DIM), jnp.float32) / math.sqrt(HIDDEN)

    # end-to-end forward (hash encode in JAX + fused MLP in Pallas)
    out = jax.block_until_ready(jax.jit(sdf_network_forward)(x, table, w1, w2, w3))
    assert out.shape == (N, OUT_DIM) and out.dtype == jnp.float32

    # correctness: Pallas MLP vs pure-JAX reference on the SAME encoding values,
    # mirroring the kernel's dtypes / accumulation rules (bf16 inputs, f32 acc)
    enc = hash_encode((x + 1.0) / 2.0, table)
    out_k = jax.block_until_ready(sdf_forward_pallas(enc, w1, w2, w3))
    h = jnp.maximum(jnp.dot(enc.astype(jnp.bfloat16), w1.astype(jnp.bfloat16),
                            preferred_element_type=jnp.float32), 0.0)
    h = jnp.maximum(jnp.dot(h, w2, preferred_element_type=jnp.float32,
                            precision=jax.lax.Precision.HIGHEST), 0.0)
    ref = jnp.sum(h * w3[:, 0][None, :], axis=1, keepdims=True)
    np.testing.assert_allclose(np.asarray(out_k), np.asarray(ref),
                               rtol=5e-4, atol=1e-5)
    print("KERNEL_OK")
</pallas_src>

<mosaic_0001>
module attributes {stable_mosaic.version = 11 : i64} {
  func.func @sdf_mlp_kernel(%arg0: i32, %arg1: memref<32x512xbf16, #tpu.memory_space<vmem>>, %arg2: memref<64x32xbf16, #tpu.memory_space<vmem>>, %arg3: memref<64x64xf32, #tpu.memory_space<vmem>>, %arg4: memref<64x1xf32, #tpu.memory_space<vmem>>, %arg5: memref<1x512xf32, #tpu.memory_space<vmem>>) attributes {dimension_semantics = [#tpu.dimension_semantics<parallel>], iteration_bounds = array<i64: 2>, scalar_prefetch = 0 : i64, scratch_operands = 0 : i64, tpu.core_type = #tpu.core_type<tc>, window_params = [{transform_indices = @transform_0, window_bounds = array<i64: 32, 512>}, {pipeline_mode = #tpu.pipeline_mode<synchronous>, transform_indices = @transform_1, window_bounds = array<i64: 64, 32>}, {pipeline_mode = #tpu.pipeline_mode<synchronous>, transform_indices = @transform_2, window_bounds = array<i64: 64, 64>}, {pipeline_mode = #tpu.pipeline_mode<synchronous>, transform_indices = @transform_3, window_bounds = array<i64: 64, 1>}, {transform_indices = @transform_4, window_bounds = array<i64: 1, 512>}]} {
    %c0 = arith.constant 0 : index
    %c0_0 = arith.constant 0 : index
    %0 = vector.load %arg2[%c0, %c0_0] : memref<64x32xbf16, #tpu.memory_space<vmem>>, vector<64x32xbf16>
    %c0_1 = arith.constant 0 : index
    %c0_2 = arith.constant 0 : index
    %1 = vector.load %arg1[%c0_1, %c0_2] : memref<32x512xbf16, #tpu.memory_space<vmem>>, vector<32x512xbf16>
    %cst = arith.constant dense<0.000000e+00> : vector<64x512xf32>
    %2 = tpu.matmul %0, %1, %cst {dimension_numbers = #tpu.dot_dimension_numbers<[1], [0], [0], [1], [0, 0, 1, 1], [], []>} : vector<64x32xbf16>, vector<32x512xbf16>, vector<64x512xf32> -> vector<64x512xf32>
    %cst_3 = arith.constant 0.000000e+00 : f32
    %3 = vector.broadcast %cst_3 : f32 to vector<64x512xf32>
    %4 = arith.maximumf %2, %3 : vector<64x512xf32>
    %c0_4 = arith.constant 0 : index
    %c0_5 = arith.constant 0 : index
    %5 = vector.load %arg3[%c0_4, %c0_5] : memref<64x64xf32, #tpu.memory_space<vmem>>, vector<64x64xf32>
    %cst_6 = arith.constant dense<0.000000e+00> : vector<64x512xf32>
    %6 = tpu.matmul %5, %4, %cst_6 {dimension_numbers = #tpu.dot_dimension_numbers<[1], [0], [0], [1], [0, 0, 1, 1], [], []>} : vector<64x64xf32>, vector<64x512xf32>, vector<64x512xf32> -> vector<64x512xf32>
    %cst_7 = arith.constant 0.000000e+00 : f32
    %7 = vector.broadcast %cst_7 : f32 to vector<64x512xf32>
    %8 = arith.maximumf %6, %7 : vector<64x512xf32>
    %c0_8 = arith.constant 0 : index
    %c0_9 = arith.constant 0 : index
    %9 = vector.load %arg4[%c0_8, %c0_9] : memref<64x1xf32, #tpu.memory_space<vmem>>, vector<64x1xf32>
    %10 = vector.broadcast %9 : vector<64x1xf32> to vector<64x512xf32>
    %11 = arith.mulf %8, %10 : vector<64x512xf32>
    %cst_10 = arith.constant dense<0.000000e+00> : vector<512xf32>
    %12 = vector.multi_reduction <add>, %11, %cst_10 [0] : vector<64x512xf32> to vector<512xf32>
    %13 = vector.shape_cast %12 : vector<512xf32> to vector<1x512xf32>
    %c0_11 = arith.constant 0 : index
    %c0_12 = arith.constant 0 : index
    %14 = vector.load %arg5[%c0_11, %c0_12] : memref<1x512xf32, #tpu.memory_space<vmem>>, vector<1x512xf32>
    tpu.vector_store %arg5[%c0_11, %c0_12], %13 {strides = array<i32>} : memref<1x512xf32, #tpu.memory_space<vmem>>, vector<1x512xf32>,
    return
  }
  func.func @transform_0(%arg0: i32) -> (i32, i32) {
    %c0_i32 = arith.constant 0 : i32
    %c0_i32_0 = arith.constant 0 : i32
    return %c0_i32, %arg0 : i32, i32
  }
  func.func @transform_1(%arg0: i32) -> (i32, i32) {
    %c0_i32 = arith.constant 0 : i32
    %c0_i32_0 = arith.constant 0 : i32
    %c0_i32_1 = arith.constant 0 : i32
    return %c0_i32, %c0_i32_0 : i32, i32
  }
  func.func @transform_2(%arg0: i32) -> (i32, i32) {
    %c0_i32 = arith.constant 0 : i32
    %c0_i32_0 = arith.constant 0 : i32
    %c0_i32_1 = arith.constant 0 : i32
    return %c0_i32, %c0_i32_0 : i32, i32
  }
  func.func @transform_3(%arg0: i32) -> (i32, i32) {
    %c0_i32 = arith.constant 0 : i32
    %c0_i32_0 = arith.constant 0 : i32
    %c0_i32_1 = arith.constant 0 : i32
    return %c0_i32, %c0_i32_0 : i32, i32
  }
  func.func @transform_4(%arg0: i32) -> (i32, i32) {
    %c0_i32 = arith.constant 0 : i32
    %c0_i32_0 = arith.constant 0 : i32
    return %c0_i32, %arg0 : i32, i32
  }
}

</mosaic_0001>

<llo_original>
// kernel: sdf_network_forward.1
$region0: #{sdf_network_forward.1}
  #allocation0 [shape = 'u32[]', space=smem, size = 0x4, offset = 0x4, fixed_abs, tag = 'smem constant byte address 0x4 - core index']
  #allocation1 [shape = 'u32[144,128]{1,0:T(1,128)}', space=vmem, size = 0x12000, scoped, tag = 'internal scratch']
  %s0 = inlined_call_operand.vmem [shape: bf16[32,1024], index: 0, kind: input, shape index: {}]
  %s1 = inlined_call_operand.vmem [shape: bf16[64,32], index: 1, kind: input, shape index: {}]
  %s2 = inlined_call_operand.vmem [shape: f32[64,64], index: 2, kind: input, shape index: {}]
  %s3 = inlined_call_operand.vmem [shape: f32[64,1], index: 3, kind: input, shape index: {}]
  %s4 = inlined_call_operand.vmem [shape: f32[1,1024], index: 4, kind: output, shape index: {}]
  %s5 = sld [smem:[#allocation0]]
  $region72: #{sdf_network_forward.1} parent=0
    _
  %s7 = ssub.s32 1, %s5
  %s8 = scalar_select 0, %s7, %s5
  $region1: #{sdf_network_forward.1} parent=0
    #allocation2 [shape = 'u8[65536]{0}', space=vmem, size = 0x10000, scoped, tag = 'input window, operand 0']
    loop: start=0, step=1, limit=4
    $region2: #{sdf_network_forward.1} parent=1 // loop_pre_header
      _
    $region3: #{sdf_network_forward.1} parent=1 // loop_header
      %s10 = sphi 0, %s14
      %p11 = scmp.ge.s32.totalorder %s10, 4
      %s20 = sphi 0, %s22
      %s23 = sphi 0, %s20
      %s24 = sphi 0, %s23
      %s40 = sphi 0, %s24
      %s44 = sphi 0, %s44
      %s46 = sphi 0, %s44
      %s47 = sphi 0, %s46
      %s61 = sphi 0, %s47
      %s65 = sphi 0, %s65
      %s67 = sphi 0, %s65
      %s68 = sphi 0, %s67
      %s82 = sphi 0, %s68
      %s86 = sphi 0, %s86
      %s88 = sphi 0, %s86
      %s89 = sphi 0, %s88
      %s103 = sphi 0, %s89
      %s109 = sphi 0, %s111
      %s112 = sphi 0, %s109
      %s113 = sphi 0, %s112
      %s129 = sphi 0, %s113
    $region4: #{sdf_network_forward.1} parent=1 // loop_header_branch
      %13 = sbr.rel (%p11) target = $region8
    $region5: #{sdf_network_forward.1} parent=1 // loop_body
      %s15 = ssub.s32 %s10, 1
      %s16 = ssub.s32 %s10, 2
      %s17 = sadd.s32 %s10, 1
      %s18 = ssub.s32 %s10, %s17
      %p19 = scmp.eq.s32.totalorder %s18, 0
      %s21 = sadd.s32 %s20, 1
      %s22 = scalar_select %p19, %s20, %s21
      %p25 = pneg %p19
      %p26 = scmp.eq.s32.totalorder %s10, 1
      %p27 = por %p25, %p26
      %p28 = scmp.ne.s32.totalorder %s20, %s23
      %p29 = scmp.eq.s32.totalorder %s10, 0
      %p30 = por %p28, %p29
      %p31 = scmp.ne.s32.totalorder %s20, %s23
      %p32 = scmp.eq.s32.totalorder %s15, 1
      %p33 = por %p31, %p32
      %p34 = scmp.ne.s32.totalorder %s23, %s24
      %p35 = scmp.eq.s32.totalorder %s15, 0
      %p36 = por %p34, %p35
      %p37 = scmp.ne.s32.totalorder %s23, %s24
      %p38 = scmp.eq.s32.totalorder %s16, 1
      %p39 = por %p37, %p38
      %p41 = scmp.ne.s32.totalorder %s24, %s40
      %p42 = scmp.eq.s32.totalorder %s16, 0
      %p43 = por %p41, %p42
      %s45 = sadd.s32 %s44, 1
      %p48 = scmp.eq.s32.totalorder %s10, 1
      %p49 = scmp.ne.s32.totalorder %s44, %s46
      %p50 = scmp.eq.s32.totalorder %s10, 0
      %p51 = por %p49, %p50
      %p52 = scmp.ne.s32.totalorder %s44, %s46
      %p53 = scmp.eq.s32.totalorder %s15, 1
      %p54 = por %p52, %p53
      %p55 = scmp.ne.s32.totalorder %s46, %s47
      %p56 = scmp.eq.s32.totalorder %s15, 0
      %p57 = por %p55, %p56
      %p58 = scmp.ne.s32.totalorder %s46, %s47
      %p59 = scmp.eq.s32.totalorder %s16, 1
      %p60 = por %p58, %p59
      %p62 = scmp.ne.s32.totalorder %s47, %s61
      %p63 = scmp.eq.s32.totalorder %s16, 0
      %p64 = por %p62, %p63
      %s66 = sadd.s32 %s65, 1
      %p69 = scmp.eq.s32.totalorder %s10, 1
      %p70 = scmp.ne.s32.totalorder %s65, %s67
      %p71 = scmp.eq.s32.totalorder %s10, 0
      %p72 = por %p70, %p71
      %p73 = scmp.ne.s32.totalorder %s65, %s67
      %p74 = scmp.eq.s32.totalorder %s15, 1
      %p75 = por %p73, %p74
      %p76 = scmp.ne.s32.totalorder %s67, %s68
      %p77 = scmp.eq.s32.totalorder %s15, 0
      %p78 = por %p76, %p77
      %p79 = scmp.ne.s32.totalorder %s67, %s68
      %p80 = scmp.eq.s32.totalorder %s16, 1
      %p81 = por %p79, %p80
      %p83 = scmp.ne.s32.totalorder %s68, %s82
      %p84 = scmp.eq.s32.totalorder %s16, 0
      %p85 = por %p83, %p84
      %s87 = sadd.s32 %s86, 1
      %p90 = scmp.eq.s32.totalorder %s10, 1
      %p91 = scmp.ne.s32.totalorder %s86, %s88
      %p92 = scmp.eq.s32.totalorder %s10, 0
      %p93 = por %p91, %p92
      %p94 = scmp.ne.s32.totalorder %s86, %s88
      %p95 = scmp.eq.s32.totalorder %s15, 1
      %p96 = por %p94, %p95
      %p97 = scmp.ne.s32.totalorder %s88, %s89
      %p98 = scmp.eq.s32.totalorder %s15, 0
      %p99 = por %p97, %p98
      %p100 = scmp.ne.s32.totalorder %s88, %s89
      %p101 = scmp.eq.s32.totalorder %s16, 1
      %p102 = por %p100, %p101
      %p104 = scmp.ne.s32.totalorder %s89, %s103
      %p105 = scmp.eq.s32.totalorder %s16, 0
      %p106 = por %p104, %p105
      %s107 = ssub.s32 %s10, %s17
      %p108 = scmp.eq.s32.totalorder %s107, 0
      %s110 = sadd.s32 %s109, 1
      %s111 = scalar_select %p108, %s109, %s110
      %p114 = pneg %p108
      %p115 = scmp.eq.s32.totalorder %s10, 1
      %p116 = por %p114, %p115
      %p117 = scmp.ne.s32.totalorder %s109, %s112
      %p118 = scmp.eq.s32.totalorder %s10, 0
      %p119 = por %p117, %p118
      %p120 = scmp.ne.s32.totalorder %s109, %s112
      %p121 = scmp.eq.s32.totalorder %s15, 1
      %p122 = por %p120, %p121
      %p123 = scmp.ne.s32.totalorder %s112, %s113
      %p124 = scmp.eq.s32.totalorder %s15, 0
      %p125 = por %p123, %p124
      %p126 = scmp.ne.s32.totalorder %s112, %s113
      %p127 = scmp.eq.s32.totalorder %s16, 1
      %p128 = por %p126, %p127
      %p130 = scmp.ne.s32.totalorder %s113, %s129
      %p131 = scmp.eq.s32.totalorder %s16, 0
      %p132 = por %p130, %p131
      %p133 = scmp.le.s32.totalorder 1, %s10
      %p134 = scmp.lt.s32.totalorder %s10, 3
      %p135 = pnand %p133, %p134
      %p136 = pneg %p135
      // Predicated region
      $region9: #{sdf_network_forward.1} parent=5 // pred_check
        _
      $region10: #{sdf_network_forward.1} parent=5 // pred_check_branch
        %138 = sbr.rel (%p135) target = $region12
      $region11: #{sdf_network_forward.1} parent=5 // pred_region
        %s139 = ssub.s32 %s10, 1
        // Predicated region
        $region13: #{sdf_network_forward.1} parent=11 // pred_check
          %p140 = pneg %p57
        $region14: #{sdf_network_forward.1} parent=11 // pred_check_branch
          %142 = sbr.rel (%p140) target = $region16
        $region15: #{sdf_network_forward.1} parent=11 // pred_region
          _
        $region16: #{sdf_network_forward.1} parent=11 // pred_fallthru
          _
        // Predicated region
        $region17: #{sdf_network_forward.1} parent=11 // pred_check
          %p143 = pneg %p78
        $region18: #{sdf_network_forward.1} parent=11 // pred_check_branch
          %145 = sbr.rel (%p143) target = $region20
        $region19: #{sdf_network_forward.1} parent=11 // pred_region
          _
        $region20: #{sdf_network_forward.1} parent=11 // pred_fallthru
          _
        // Predicated region
        $region21: #{sdf_network_forward.1} parent=11 // pred_check
          %p146 = pneg %p99
        $region22: #{sdf_network_forward.1} parent=11 // pred_check_branch
          %148 = sbr.rel (%p146) target = $region24
        $region23: #{sdf_network_forward.1} parent=11 // pred_region
          _
        $region24: #{sdf_network_forward.1} parent=11 // pred_fallthru
          _
      $region12: #{sdf_network_forward.1} parent=5 // pred_fallthru
        _
      %p149 = scmp.lt.s32.totalorder %s10, 2
      // Predicated region
      $region25: #{sdf_network_forward.1} parent=5 // pred_check
        %p150 = pneg %p149
      $region26: #{sdf_network_forward.1} parent=5 // pred_check_branch
        %152 = sbr.rel (%p150) target = $region28
      $region27: #{sdf_network_forward.1} parent=5 // pred_region
        // Predicated region
        $region29: #{sdf_network_forward.1} parent=27 // pred_check
          %p153 = pneg %p30
        $region30: #{sdf_network_forward.1} parent=27 // pred_check_branch
          %155 = sbr.rel (%p153) target = $region32
        $region31: #{sdf_network_forward.1} parent=27 // pred_region
          %s156 = sand.u32 %s20, 1
          %s157 = sand.u32 %s20, 1
          %s158 = smul.addr %s157, 64
          %s159 = scalar_lea.vmem [#allocation2], %s158
          %s160 = smul.u32 4, %s10
          %s161 = smul.addr %s160, 4
          %s162 = scalar_lea.vmem %s0, %s161
          // Predicated region
          $region33: #{sdf_network_forward.1} parent=31 // pred_check
            _
          $region34: #{sdf_network_forward.1} parent=31 // pred_check_branch
            %164 = sbr.rel (0) target = $region36
          $region35: #{sdf_network_forward.1} parent=31 // pred_region
            // Predicated region
            $region37: #{sdf_network_forward.1} parent=35 // pred_check
              _
            $region38: #{sdf_network_forward.1} parent=35 // pred_check_branch
              %166 = sbr.rel (0) target = $region40
            $region39: #{sdf_network_forward.1} parent=35 // pred_region
              loop: start=0, step=1, limit=1
              $region41: #{sdf_network_forward.1} parent=39 // loop_pre_header
                _
              $region42: #{sdf_network_forward.1} parent=39 // loop_header
                %s168 = sphi 0, %s172
                %p169 = scmp.ge.s32.totalorder %s168, 1
                %s173 = sphi %s162, %s162
                %s174 = sphi %s159, %s159
              $region43: #{sdf_network_forward.1} parent=39 // loop_header_branch
                %171 = sbr.rel (%p169) target = $region47
              $region44: #{sdf_network_forward.1} parent=39 // loop_body
                %v175 = vld [vmem:[%s173] sm:$0xff]
                %176 = vst [vmem:[%s174] sm:$0xff] %v175
                %v177 = vld [vmem:[%s173 + $0x8] sm:$0xff]
                %178 = vst [vmem:[%s174 + $0x8] sm:$0xff] %v177
                %v179 = vld [vmem:[%s173 + $0x20] sm:$0xff]
                %180 = vst [vmem:[%s174 + $0x10] sm:$0xff] %v179
                %v181 = vld [vmem:[%s173 + $0x28] sm:$0xff]
                %182 = vst [vmem:[%s174 + $0x18] sm:$0xff] %v181
                %v183 = vld [vmem:[%s173 + $0x40] sm:$0xff]
                %184 = vst [vmem:[%s174 + $0x20] sm:$0xff] %v183
                %v185 = vld [vmem:[%s173 + $0x48] sm:$0xff]
                %186 = vst [vmem:[%s174 + $0x28] sm:$0xff] %v185
                %v187 = vld [vmem:[%s173 + $0x60] sm:$0xff]
                %188 = vst [vmem:[%s174 + $0x30] sm:$0xff] %v187
                %v189 = vld [vmem:[%s173 + $0x68] sm:$0xff]
                %190 = vst [vmem:[%s174 + $0x38] sm:$0xff] %v189
              $region45: #{sdf_network_forward.1} parent=39 // loop_footer
                %s172 = sadd.s32 1, %s168
              $region46: #{sdf_network_forward.1} parent=39 // loop_footer_branch
                %167 = sbr.rel target = $region42
              $region47: #{sdf_network_forward.1} parent=39 // loop_exit
                _
            $region40: #{sdf_network_forward.1} parent=35 // pred_fallthru
              _
            // Predicated region
            $region48: #{sdf_network_forward.1} parent=35 // pred_check
              _
            $region49: #{sdf_network_forward.1} parent=35 // pred_check_branch
              %192 = sbr.rel target = $region51
            $region50: #{sdf_network_forward.1} parent=35 // pred_region
              _
            $region51: #{sdf_network_forward.1} parent=35 // pred_fallthru
              _
          $region36: #{sdf_network_forward.1} parent=31 // pred_fallthru
            _
          %193 = vnop
        $region32: #{sdf_network_forward.1} parent=27 // pred_fallthru
          _
      $region28: #{sdf_network_forward.1} parent=5 // pred_fallthru
        _
      %p194 = scmp.le.s32.totalorder 1, %s10
      %p195 = scmp.lt.s32.totalorder %s10, 3
      %p196 = pnand %p194, %p195
      %p197 = pneg %p196
      // Predicated region
      $region52: #{sdf_network_forward.1} parent=5 // pred_check
        _
      $region53: #{sdf_network_forward.1} parent=5 // pred_check_branch
        %199 = sbr.rel (%p196) target = $region55
      $region54: #{sdf_network_forward.1} parent=5 // pred_region
        %s200 = ssub.s32 %s10, 1
        %s201 = sand.u32 %s23, 1
        %s202 = sand.u32 %s23, 1
        %s203 = smul.addr %s202, 64
        %s204 = scalar_lea.vmem [#allocation2], %s203
        // Predicated region
        $region56: #{sdf_network_forward.1} parent=54 // pred_check
          %p205 = pneg %p36
        $region57: #{sdf_network_forward.1} parent=54 // pred_check_branch
          %207 = sbr.rel (%p205) target = $region59
        $region58: #{sdf_network_forward.1} parent=54 // pred_region
          _
        $region59: #{sdf_network_forward.1} parent=54 // pred_fallthru
          _
        %s208 = sand.u32 %s23, 1
        %s209 = sand.u32 %s23, 1
        %s210 = smul.addr %s209, 64
        %s211 = scalar_lea.vmem [#allocation2], %s210
        %p212 = pneg %p36
        %p213 = pneg %p33
        %p214 = pneg %p57
        %p215 = pneg %p54
        %p216 = pneg %p78
        %p217 = pneg %p75
        %p218 = pneg %p99
        %p219 = pneg %p96
        %p220 = pneg %p125
        %p221 = pneg %p122
        %s222 = smul.u32 4, %s15
        %p223 = scmp.lt.s32.totalorder %s222, 7
        %s224 = scalar_select %p223, %s222, 7
        %s225 = scalar_lea.vmem %s4, %s224
        %s226 = smul.u32 4, %s15
        %s227 = smul.u32 4, %s15
        %p228 = scmp.lt.s32.totalorder %s227, 7
        %s229 = scalar_select %p228, %s227, 7
        %s230 = scalar_lea.vmem %s4, %s229
        %s231 = smul.u32 4, %s15
        %v233 = vld [vmem:[%s1] sm:$0xf]
        %v234 = vld [vmem:[%s1 + $0x4] sm:$0xf]
        %v235 = vld [vmem:[%s1 + $0x8] sm:$0xf]
        %v236 = vld [vmem:[%s1 + $0xc] sm:$0xf]
        %v237 = vld [vmem:[%s1 + $0x10] sm:$0xf]
        %v238 = vld [vmem:[%s1 + $0x14] sm:$0xf]
        %v239 = vld [vmem:[%s1 + $0x18] sm:$0xf]
        %v240 = vld [vmem:[%s1 + $0x1c] sm:$0xf]
        %v241 = vld [vmem:[%s204] sm:$0xff]
        %v242 = vld [vmem:[%s204 + $0x8] sm:$0xff]
        %v243 = vld [vmem:[%s204 + $0x10] sm:$0xff]
        %v244 = vld [vmem:[%s204 + $0x18] sm:$0xff]
        %v245 = vld [vmem:[%s204 + $0x20] sm:$0xff]
        %v246 = vld [vmem:[%s204 + $0x28] sm:$0xff]
        %v247 = vld [vmem:[%s204 + $0x30] sm:$0xff]
        %v248 = vld [vmem:[%s204 + $0x38] sm:$0xff]
        %v257 = vunpack.c.l.b16 %v233
        %v258 = vunpack.c.l.b16 %v234
        %v259 = vunpack.c.l.b16 %v235
        %v260 = vunpack.c.l.b16 %v236
        %v261 = vunpack.c.l.b16 %v237
        %v262 = vunpack.c.l.b16 %v238
        %v263 = vunpack.c.l.b16 %v239
        %v264 = vunpack.c.l.b16 %v240
        %v265 = vpack.c.b16 %v258, %v257
        %v266 = vpack.c.b16 %v260, %v259
        %v267 = vpack.c.b16 %v262, %v261
        %v268 = vpack.c.b16 %v264, %v263
        %v277 = vunpack.c.l.b16 %v241
        %v278 = vunpack.c.h.b16 %v241
        %v279 = vunpack.c.l.b16 %v242
        %v280 = vunpack.c.h.b16 %v242
        %v281 = vunpack.c.l.b16 %v243
        %v282 = vunpack.c.h.b16 %v243
        %v283 = vunpack.c.l.b16 %v244
        %v284 = vunpack.c.h.b16 %v244
        %v285 = vunpack.c.l.b16 %v245
        %v286 = vunpack.c.h.b16 %v245
        %v287 = vunpack.c.l.b16 %v246
        %v288 = vunpack.c.h.b16 %v246
        %v289 = vunpack.c.l.b16 %v247
        %v290 = vunpack.c.h.b16 %v247
        %v291 = vunpack.c.l.b16 %v248
        %v292 = vunpack.c.h.b16 %v248
        %v293 = vpack.c.b16 %v281, %v277
        %v294 = vpack.c.b16 %v282, %v278
        %v295 = vpack.c.b16 %v283, %v279
        %v296 = vpack.c.b16 %v284, %v280
        %v297 = vpack.c.b16 %v289, %v285
        %v298 = vpack.c.b16 %v290, %v286
        %v299 = vpack.c.b16 %v291, %v287
        %v300 = vpack.c.b16 %v292, %v288
        %vm309 = vcmask 261120
        %v311 = vsel %vm309, %v265, 0
        %v314 = vsel %vm309, %v266, 0
        %v317 = vsel %vm309, %v267, 0
        %v320 = vsel %vm309, %v268, 0
        %322 = vmatprep.subr.bf16.mxu0 0
        %323 = vmatpush1.bf16.msra.mxu0 0
        %324 = vmatprep.subr.bf16.mxu0 0
        %325 = vmatpush1.bf16.msra.mxu0 0
        %326 = vmatprep.subr.bf16.mxu0 0
        %327 = vmatpush1.bf16.msra.mxu0 0
        %328 = vmatprep.subr.bf16.mxu0 0
        %329 = vmatpush1.bf16.msra.mxu0 0
        %330 = vmatprep.subr.bf16.mxu0 0
        %331 = vmatpush1.bf16.msra.mxu0 0
        %332 = vmatprep.subr.bf16.mxu0 0
        %333 = vmatpush1.bf16.msra.mxu0 0
        %334 = vmatprep.subr.bf16.mxu0 %v298
        %335 = vmatpush1.bf16.msra.mxu0 %v297
        %336 = vmatprep.subr.bf16.mxu0 %v294
        %337 = vmatpush1.bf16.msra.mxu0 %v293
        %338 = vmatprep.subr.bf16.mxu0 0
        %339 = vmatpush2.bf16.msra.mxu0 0
        %340 = vmatprep.subr.bf16.mxu0 0
        %341 = vmatpush2.bf16.msra.mxu0 0
        %342 = vmatprep.subr.bf16.mxu0 0
        %343 = vmatpush2.bf16.msra.mxu0 0
        %344 = vmatprep.subr.bf16.mxu0 0
        %345 = vmatpush2.bf16.msra.mxu0 0
        %346 = vmatprep.subr.bf16.mxu0 0
        %347 = vmatpush2.bf16.msra.mxu0 0
        %348 = vmatprep.subr.bf16.mxu0 0
        %349 = vmatpush2.bf16.msra.mxu0 0
        %350 = vmatprep.subr.bf16.mxu0 0
        %351 = vmatpush2.bf16.msra.mxu0 0
        %352 = vmatprep.subr.bf16.mxu0 0
        %353 = vmatpush2.bf16.msra.mxu0 0
        %354 = vmatprep.mubr.bf16.mxu0 0
        %355 = vmatmul.mubr.bf16.gmra.mxu0 %v311
        %v356 = vpop.f32.mrf.mxu0
        %v357 = vadd.f32 0.0, %v356
        %v358 = vpop.f32.mrf.mxu0
        %v359 = vadd.f32 0.0, %v358
        %v360 = vpop.f32.mrf.mxu0
        %v361 = vadd.f32 0.0, %v360
        %v362 = vpop.f32.mrf.mxu0
        %v363 = vadd.f32 0.0, %v362
        %364 = vmatprep.mubr.bf16.mxu0 0
        %365 = vmatmul.mubr.bf16.gmra.mxu0 %v314
        %v366 = vpop.f32.mrf.mxu0
        %v367 = vadd.f32 0.0, %v366
        %v368 = vpop.f32.mrf.mxu0
        %v369 = vadd.f32 0.0, %v368
        %v370 = vpop.f32.mrf.mxu0
        %v371 = vadd.f32 0.0, %v370
        %v372 = vpop.f32.mrf.mxu0
        %v373 = vadd.f32 0.0, %v372
        %374 = vmatprep.mubr.bf16.mxu0 0
        %375 = vmatmul.mubr.bf16.gmra.mxu0 %v317
        %v376 = vpop.f32.mrf.mxu0
        %v377 = vadd.f32 0.0, %v376
        %v378 = vpop.f32.mrf.mxu0
        %v379 = vadd.f32 0.0, %v378
        %v380 = vpop.f32.mrf.mxu0
        %v381 = vadd.f32 0.0, %v380
        %v382 = vpop.f32.mrf.mxu0
        %v383 = vadd.f32 0.0, %v382
        %384 = vmatprep.mubr.bf16.mxu0 0
        %385 = vmatmul.mubr.bf16.gmra.mxu0 %v320
        %v386 = vpop.f32.mrf.mxu0
        %v387 = vadd.f32 0.0, %v386
        %v388 = vpop.f32.mrf.mxu0
        %v389 = vadd.f32 0.0, %v388
        %v390 = vpop.f32.mrf.mxu0
        %v391 = vadd.f32 0.0, %v390
        %v392 = vpop.f32.mrf.mxu0
        %v393 = vadd.f32 0.0, %v392
        %394 = vdwg.mxu0
        %395 = vmatprep.subr.bf16.mxu0 0
        %396 = vmatpush1.bf16.msra.mxu0 0
        %397 = vmatprep.subr.bf16.mxu0 0
        %398 = vmatpush1.bf16.msra.mxu0 0
        %399 = vmatprep.subr.bf16.mxu0 0
        %400 = vmatpush1.bf16.msra.mxu0 0
        %401 = vmatprep.subr.bf16.mxu0 0
        %402 = vmatpush1.bf16.msra.mxu0 0
        %403 = vmatprep.subr.bf16.mxu0 0
        %404 = vmatpush1.bf16.msra.mxu0 0
        %405 = vmatprep.subr.bf16.mxu0 0
        %406 = vmatpush1.bf16.msra.mxu0 0
        %407 = vmatprep.subr.bf16.mxu0 %v300
        %408 = vmatpush1.bf16.msra.mxu0 %v299
        %409 = vmatprep.subr.bf16.mxu0 %v296
        %410 = vmatpush1.bf16.msra.mxu0 %v295
        %411 = vmatprep.subr.bf16.mxu0 0
        %412 = vmatpush2.bf16.msra.mxu0 0
        %413 = vmatprep.subr.bf16.mxu0 0
        %414 = vmatpush2.bf16.msra.mxu0 0
        %415 = vmatprep.subr.bf16.mxu0 0
        %416 = vmatpush2.bf16.msra.mxu0 0
        %417 = vmatprep.subr.bf16.mxu0 0
        %418 = vmatpush2.bf16.msra.mxu0 0
        %419 = vmatprep.subr.bf16.mxu0 0
        %420 = vmatpush2.bf16.msra.mxu0 0
        %421 = vmatprep.subr.bf16.mxu0 0
        %422 = vmatpush2.bf16.msra.mxu0 0
        %423 = vmatprep.subr.bf16.mxu0 0
        %424 = vmatpush2.bf16.msra.mxu0 0
        %425 = vmatprep.subr.bf16.mxu0 0
        %426 = vmatpush2.bf16.msra.mxu0 0
        %427 = vmatprep.mubr.bf16.mxu0 0
        %428 = vmatmul.mubr.bf16.gmra.mxu0 %v311
        %v429 = vpop.f32.mrf.mxu0
        %v430 = vadd.f32 0.0, %v429
        %v431 = vpop.f32.mrf.mxu0
        %v432 = vadd.f32 0.0, %v431
        %v433 = vpop.f32.mrf.mxu0
        %v434 = vadd.f32 0.0, %v433
        %v435 = vpop.f32.mrf.mxu0
        %v436 = vadd.f32 0.0, %v435
        %437 = vmatprep.mubr.bf16.mxu0 0
        %438 = vmatmul.mubr.bf16.gmra.mxu0 %v314
        %v439 = vpop.f32.mrf.mxu0
        %v440 = vadd.f32 0.0, %v439
        %v441 = vpop.f32.mrf.mxu0
        %v442 = vadd.f32 0.0, %v441
        %v443 = vpop.f32.mrf.mxu0
        %v444 = vadd.f32 0.0, %v443
        %v445 = vpop.f32.mrf.mxu0
        %v446 = vadd.f32 0.0, %v445
        %447 = vmatprep.mubr.bf16.mxu0 0
        %448 = vmatmul.mubr.bf16.gmra.mxu0 %v317
        %v449 = vpop.f32.mrf.mxu0
        %v450 = vadd.f32 0.0, %v449
        %v451 = vpop.f32.mrf.mxu0
        %v452 = vadd.f32 0.0, %v451
        %v453 = vpop.f32.mrf.mxu0
        %v454 = vadd.f32 0.0, %v453
        %v455 = vpop.f32.mrf.mxu0
        %v456 = vadd.f32 0.0, %v455
        %457 = vmatprep.mubr.bf16.mxu0 0
        %458 = vmatmul.mubr.bf16.gmra.mxu0 %v320
        %v459 = vpop.f32.mrf.mxu0
        %v460 = vadd.f32 0.0, %v459
        %v461 = vpop.f32.mrf.mxu0
        %v462 = vadd.f32 0.0, %v461
        %v463 = vpop.f32.mrf.mxu0
        %v464 = vadd.f32 0.0, %v463
        %v465 = vpop.f32.mrf.mxu0
        %v466 = vadd.f32 0.0, %v465
        %467 = vdwg.mxu0
        %v468 = vmax.f32 %v357, 0.0
        %v469 = vmax.f32 %v359, 0.0
        %v470 = vmax.f32 %v430, 0.0
        %v471 = vmax.f32 %v432, 0.0
        %v472 = vmax.f32 %v361, 0.0
        %v473 = vmax.f32 %v363, 0.0
        %v474 = vmax.f32 %v434, 0.0
        %v475 = vmax.f32 %v436, 0.0
        %v476 = vmax.f32 %v367, 0.0
        %v477 = vmax.f32 %v369, 0.0
        %v478 = vmax.f32 %v440, 0.0
        %v479 = vmax.f32 %v442, 0.0
        %v480 = vmax.f32 %v371, 0.0
        %v481 = vmax.f32 %v373, 0.0
        %v482 = vmax.f32 %v444, 0.0
        %v483 = vmax.f32 %v446, 0.0
        %v484 = vmax.f32 %v377, 0.0
        %v485 = vmax.f32 %v379, 0.0
        %v486 = vmax.f32 %v450, 0.0
        %v487 = vmax.f32 %v452, 0.0
        %v488 = vmax.f32 %v381, 0.0
        %v489 = vmax.f32 %v383, 0.0
        %v490 = vmax.f32 %v454, 0.0
        %v491 = vmax.f32 %v456, 0.0
        %v492 = vmax.f32 %v387, 0.0
        %v493 = vmax.f32 %v389, 0.0
        %v494 = vmax.f32 %v460, 0.0
        %v495 = vmax.f32 %v462, 0.0
        %v496 = vmax.f32 %v391, 0.0
        %v497 = vmax.f32 %v393, 0.0
        %v498 = vmax.f32 %v464, 0.0
        %v499 = vmax.f32 %v466, 0.0
        %v500 = vld [vmem:[%s2] sm:$0xff]
        %v501 = vld [vmem:[%s2 + $0x8] sm:$0xff]
        %v502 = vld [vmem:[%s2 + $0x10] sm:$0xff]
        %v503 = vld [vmem:[%s2 + $0x18] sm:$0xff]
        %v504 = vld [vmem:[%s2 + $0x20] sm:$0xff]
        %v505 = vld [vmem:[%s2 + $0x28] sm:$0xff]
        %v506 = vld [vmem:[%s2 + $0x30] sm:$0xff]
        %v507 = vld [vmem:[%s2 + $0x38] sm:$0xff]
        %vm508 = vcmask 523264
        %v510 = vsel %vm508, %v500, 0
        %v513 = vsel %vm508, %v501, 0
        %v516 = vsel %vm508, %v502, 0
        %v519 = vsel %vm508, %v503, 0
        %v522 = vsel %vm508, %v504, 0
        %v525 = vsel %vm508, %v505, 0
        %v528 = vsel %vm508, %v506, 0
        %v531 = vsel %vm508, %v507, 0
        %533 = vmatprep.subr.mxu0 0.0
        %534 = vmatpush1.msra.mxu0 0.0
        %535 = vmatprep.subr.mxu0 0.0
        %536 = vmatpush1.msra.mxu0 0.0
        %537 = vmatprep.subr.mxu0 0.0
        %538 = vmatpush1.msra.mxu0 0.0
        %539 = vmatprep.subr.mxu0 0.0
        %540 = vmatpush1.msra.mxu0 0.0
        %541 = vmatprep.subr.mxu0 0.0
        %542 = vmatpush1.msra.mxu0 0.0
        %543 = vmatprep.subr.mxu0 0.0
        %544 = vmatpush1.msra.mxu0 0.0
        %545 = vmatprep.subr.mxu0 0.0
        %546 = vmatpush1.msra.mxu0 0.0
        %547 = vmatprep.subr.mxu0 0.0
        %548 = vmatpush1.msra.mxu0 0.0
        %549 = vmatprep.subr.mxu0 %v497
        %550 = vmatpush1.msra.mxu0 %v496
        %551 = vmatprep.subr.mxu0 %v493
        %552 = vmatpush1.msra.mxu0 %v492
        %553 = vmatprep.subr.mxu0 %v489
        %554 = vmatpush1.msra.mxu0 %v488
        %555 = vmatprep.subr.mxu0 %v485
        %556 = vmatpush1.msra.mxu0 %v484
        %557 = vmatprep.subr.mxu0 %v481
        %558 = vmatpush1.msra.mxu0 %v480
        %559 = vmatprep.subr.mxu0 %v477
        %560 = vmatpush1.msra.mxu0 %v476
        %561 = vmatprep.subr.mxu0 %v473
        %562 = vmatpush1.msra.mxu0 %v472
        %563 = vmatprep.subr.mxu0 %v469
        %564 = vmatpush1.msra.mxu0 %v468
        %565 = vmatprep.subr.mxu0 0.0
        %566 = vmatpush2.msra.mxu0 0.0
        %567 = vmatprep.subr.mxu0 0.0
        %568 = vmatpush2.msra.mxu0 0.0
        %569 = vmatprep.subr.mxu0 0.0
        %570 = vmatpush2.msra.mxu0 0.0
        %571 = vmatprep.subr.mxu0 0.0
        %572 = vmatpush2.msra.mxu0 0.0
        %573 = vmatprep.subr.mxu0 0.0
        %574 = vmatpush2.msra.mxu0 0.0
        %575 = vmatprep.subr.mxu0 0.0
        %576 = vmatpush2.msra.mxu0 0.0
        %577 = vmatprep.subr.mxu0 0.0
        %578 = vmatpush2.msra.mxu0 0.0
        %579 = vmatprep.subr.mxu0 0.0
        %580 = vmatpush2.msra.mxu0 0.0
        %581 = vmatprep.subr.mxu0 0.0
        %582 = vmatpush2.msra.mxu0 0.0
        %583 = vmatprep.subr.mxu0 0.0
        %584 = vmatpush2.msra.mxu0 0.0
        %585 = vmatprep.subr.mxu0 0.0
        %586 = vmatpush2.msra.mxu0 0.0
        %587 = vmatprep.subr.mxu0 0.0
        %588 = vmatpush2.msra.mxu0 0.0
        %589 = vmatprep.subr.mxu0 0.0
        %590 = vmatpush2.msra.mxu0 0.0
        %591 = vmatprep.subr.mxu0 0.0
        %592 = vmatpush2.msra.mxu0 0.0
        %593 = vmatprep.subr.mxu0 0.0
        %594 = vmatpush2.msra.mxu0 0.0
        %595 = vmatprep.subr.mxu0 0.0
        %596 = vmatpush2.msra.mxu0 0.0
        %597 = vmatprep.mubr.f32.mxu0 0.0
        %598 = vmatmul.mubr.f32.gmra.mxu0 %v510
        %v599 = vpop.f32.mrf.mxu0
        %v600 = vadd.f32 0.0, %v599
        %v601 = vpop.f32.mrf.mxu0
        %v602 = vadd.f32 0.0, %v601
        %603 = vmatprep.mubr.f32.mxu0 0.0
        %604 = vmatmul.mubr.f32.gmra.mxu0 %v513
        %v605 = vpop.f32.mrf.mxu0
        %v606 = vadd.f32 0.0, %v605
        %v607 = vpop.f32.mrf.mxu0
        %v608 = vadd.f32 0.0, %v607
        %609 = vmatprep.mubr.f32.mxu0 0.0
        %610 = vmatmul.mubr.f32.gmra.mxu0 %v516
        %v611 = vpop.f32.mrf.mxu0
        %v612 = vadd.f32 0.0, %v611
        %v613 = vpop.f32.mrf.mxu0
        %v614 = vadd.f32 0.0, %v613
        %615 = vmatprep.mubr.f32.mxu0 0.0
        %616 = vmatmul.mubr.f32.gmra.mxu0 %v519
        %v617 = vpop.f32.mrf.mxu0
        %v618 = vadd.f32 0.0, %v617
        %v619 = vpop.f32.mrf.mxu0
        %v620 = vadd.f32 0.0, %v619
        %621 = vmatprep.mubr.f32.mxu0 0.0
        %622 = vmatmul.mubr.f32.gmra.mxu0 %v522
        %v623 = vpop.f32.mrf.mxu0
        %v624 = vadd.f32 0.0, %v623
        %v625 = vpop.f32.mrf.mxu0
        %v626 = vadd.f32 0.0, %v625
        %627 = vmatprep.mubr.f32.mxu0 0.0
        %628 = vmatmul.mubr.f32.gmra.mxu0 %v525
        %v629 = vpop.f32.mrf.mxu0
        %v630 = vadd.f32 0.0, %v629
        %v631 = vpop.f32.mrf.mxu0
        %v632 = vadd.f32 0.0, %v631
        %633 = vmatprep.mubr.f32.mxu0 0.0
        %634 = vmatmul.mubr.f32.gmra.mxu0 %v528
        %v635 = vpop.f32.mrf.mxu0
        %v636 = vadd.f32 0.0, %v635
        %v637 = vpop.f32.mrf.mxu0
        %v638 = vadd.f32 0.0, %v637
        %639 = vmatprep.mubr.f32.mxu0 0.0
        %640 = vmatmul.mubr.f32.gmra.mxu0 %v531
        %v641 = vpop.f32.mrf.mxu0
        %v642 = vadd.f32 0.0, %v641
        %v643 = vpop.f32.mrf.mxu0
        %v644 = vadd.f32 0.0, %v643
        %645 = vdwg.mxu0
        %646 = vmatprep.subr.mxu0 0.0
        %647 = vmatpush1.msra.mxu0 0.0
        %648 = vmatprep.subr.mxu0 0.0
        %649 = vmatpush1.msra.mxu0 0.0
        %650 = vmatprep.subr.mxu0 0.0
        %651 = vmatpush1.msra.mxu0 0.0
        %652 = vmatprep.subr.mxu0 0.0
        %653 = vmatpush1.msra.mxu0 0.0
        %654 = vmatprep.subr.mxu0 0.0
        %655 = vmatpush1.msra.mxu0 0.0
        %656 = vmatprep.subr.mxu0 0.0
        %657 = vmatpush1.msra.mxu0 0.0
        %658 = vmatprep.subr.mxu0 0.0
        %659 = vmatpush1.msra.mxu0 0.0
        %660 = vmatprep.subr.mxu0 0.0
        %661 = vmatpush1.msra.mxu0 0.0
        %662 = vmatprep.subr.mxu0 %v499
        %663 = vmatpush1.msra.mxu0 %v498
        %664 = vmatprep.subr.mxu0 %v495
        %665 = vmatpush1.msra.mxu0 %v494
        %666 = vmatprep.subr.mxu0 %v491
        %667 = vmatpush1.msra.mxu0 %v490
        %668 = vmatprep.subr.mxu0 %v487
        %669 = vmatpush1.msra.mxu0 %v486
        %670 = vmatprep.subr.mxu0 %v483
        %671 = vmatpush1.msra.mxu0 %v482
        %672 = vmatprep.subr.mxu0 %v479
        %673 = vmatpush1.msra.mxu0 %v478
        %674 = vmatprep.subr.mxu0 %v475
        %675 = vmatpush1.msra.mxu0 %v474
        %676 = vmatprep.subr.mxu0 %v471
        %677 = vmatpush1.msra.mxu0 %v470
        %678 = vmatprep.subr.mxu0 0.0
        %679 = vmatpush2.msra.mxu0 0.0
        %680 = vmatprep.subr.mxu0 0.0
        %681 = vmatpush2.msra.mxu0 0.0
        %682 = vmatprep.subr.mxu0 0.0
        %683 = vmatpush2.msra.mxu0 0.0
        %684 = vmatprep.subr.mxu0 0.0
        %685 = vmatpush2.msra.mxu0 0.0
        %686 = vmatprep.subr.mxu0 0.0
        %687 = vmatpush2.msra.mxu0 0.0
        %688 = vmatprep.subr.mxu0 0.0
        %689 = vmatpush2.msra.mxu0 0.0
        %690 = vmatprep.subr.mxu0 0.0
        %691 = vmatpush2.msra.mxu0 0.0
        %692 = vmatprep.subr.mxu0 0.0
        %693 = vmatpush2.msra.mxu0 0.0
        %694 = vmatprep.subr.mxu0 0.0
        %695 = vmatpush2.msra.mxu0 0.0
        %696 = vmatprep.subr.mxu0 0.0
        %697 = vmatpush2.msra.mxu0 0.0
        %698 = vmatprep.subr.mxu0 0.0
        %699 = vmatpush2.msra.mxu0 0.0
        %700 = vmatprep.subr.mxu0 0.0
        %701 = vmatpush2.msra.mxu0 0.0
        %702 = vmatprep.subr.mxu0 0.0
        %703 = vmatpush2.msra.mxu0 0.0
        %704 = vmatprep.subr.mxu0 0.0
        %705 = vmatpush2.msra.mxu0 0.0
        %706 = vmatprep.subr.mxu0 0.0
        %707 = vmatpush2.msra.mxu0 0.0
        %708 = vmatprep.subr.mxu0 0.0
        %709 = vmatpush2.msra.mxu0 0.0
        %710 = vmatprep.mubr.f32.mxu0 0.0
        %711 = vmatmul.mubr.f32.gmra.mxu0 %v510
        %v712 = vpop.f32.mrf.mxu0
        %v713 = vadd.f32 0.0, %v712
        %v714 = vpop.f32.mrf.mxu0
        %v715 = vadd.f32 0.0, %v714
        %716 = vmatprep.mubr.f32.mxu0 0.0
        %717 = vmatmul.mubr.f32.gmra.mxu0 %v513
        %v718 = vpop.f32.mrf.mxu0
        %v719 = vadd.f32 0.0, %v718
        %v720 = vpop.f32.mrf.mxu0
        %v721 = vadd.f32 0.0, %v720
        %722 = vmatprep.mubr.f32.mxu0 0.0
        %723 = vmatmul.mubr.f32.gmra.mxu0 %v516
        %v724 = vpop.f32.mrf.mxu0
        %v725 = vadd.f32 0.0, %v724
        %v726 = vpop.f32.mrf.mxu0
        %v727 = vadd.f32 0.0, %v726
        %728 = vmatprep.mubr.f32.mxu0 0.0
        %729 = vmatmul.mubr.f32.gmra.mxu0 %v519
        %v730 = vpop.f32.mrf.mxu0
        %v731 = vadd.f32 0.0, %v730
        %v732 = vpop.f32.mrf.mxu0
        %v733 = vadd.f32 0.0, %v732
        %734 = vmatprep.mubr.f32.mxu0 0.0
        %735 = vmatmul.mubr.f32.gmra.mxu0 %v522
        %v736 = vpop.f32.mrf.mxu0
        %v737 = vadd.f32 0.0, %v736
        %v738 = vpop.f32.mrf.mxu0
        %v739 = vadd.f32 0.0, %v738
        %740 = vmatprep.mubr.f32.mxu0 0.0
        %741 = vmatmul.mubr.f32.gmra.mxu0 %v525
        %v742 = vpop.f32.mrf.mxu0
        %v743 = vadd.f32 0.0, %v742
        %v744 = vpop.f32.mrf.mxu0
        %v745 = vadd.f32 0.0, %v744
        %746 = vmatprep.mubr.f32.mxu0 0.0
        %747 = vmatmul.mubr.f32.gmra.mxu0 %v528
        %v748 = vpop.f32.mrf.mxu0
        %v749 = vadd.f32 0.0, %v748
        %v750 = vpop.f32.mrf.mxu0
        %v751 = vadd.f32 0.0, %v750
        %752 = vmatprep.mubr.f32.mxu0 0.0
        %753 = vmatmul.mubr.f32.gmra.mxu0 %v531
        %v754 = vpop.f32.mrf.mxu0
        %v755 = vadd.f32 0.0, %v754
        %v756 = vpop.f32.mrf.mxu0
        %v757 = vadd.f32 0.0, %v756
        %758 = vdwg.mxu0
        %v759 = vmax.f32 %v600, 0.0
        %v760 = vmax.f32 %v602, 0.0
        %v761 = vmax.f32 %v713, 0.0
        %v762 = vmax.f32 %v715, 0.0
        %v763 = vmax.f32 %v606, 0.0
        %v764 = vmax.f32 %v608, 0.0
        %v765 = vmax.f32 %v719, 0.0
        %v766 = vmax.f32 %v721, 0.0
        %v767 = vmax.f32 %v612, 0.0
        %v768 = vmax.f32 %v614, 0.0
        %v769 = vmax.f32 %v725, 0.0
        %v770 = vmax.f32 %v727, 0.0
        %v771 = vmax.f32 %v618, 0.0
        %v772 = vmax.f32 %v620, 0.0
        %v773 = vmax.f32 %v731, 0.0
        %v774 = vmax.f32 %v733, 0.0
        %v775 = vmax.f32 %v624, 0.0
        %v776 = vmax.f32 %v626, 0.0
        %v777 = vmax.f32 %v737, 0.0
        %v778 = vmax.f32 %v739, 0.0
        %v779 = vmax.f32 %v630, 0.0
        %v780 = vmax.f32 %v632, 0.0
        %v781 = vmax.f32 %v743, 0.0
        %v782 = vmax.f32 %v745, 0.0
        %v783 = vmax.f32 %v636, 0.0
        %v784 = vmax.f32 %v638, 0.0
        %v785 = vmax.f32 %v749, 0.0
        %v786 = vmax.f32 %v751, 0.0
        %v787 = vmax.f32 %v642, 0.0
        %v788 = vmax.f32 %v644, 0.0
        %v789 = vmax.f32 %v755, 0.0
        %v790 = vmax.f32 %v757, 0.0
        %v791 = vld [vmem:[%s3] sm:$0xff]
        %v792 = vld [vmem:[%s3 + $0x8] sm:$0xff]
        %v793 = vld [vmem:[%s3 + $0x10] sm:$0xff]
        %v794 = vld [vmem:[%s3 + $0x18] sm:$0xff]
        %v795 = vld [vmem:[%s3 + $0x20] sm:$0xff]
        %v796 = vld [vmem:[%s3 + $0x28] sm:$0xff]
        %v797 = vld [vmem:[%s3 + $0x30] sm:$0xff]
        %v798 = vld [vmem:[%s3 + $0x38] sm:$0xff]
        %800 = vset.pattern.permute.xlu0 0
        %801 = vperm.xlu0 %800, %v791
        %v802 = vpop.permute.xlu0 %801
        %805 = vset.pattern.permute.xlu0 0
        %806 = vperm.xlu0 %805, %v792
        %v807 = vpop.permute.xlu0 %806
        %810 = vset.pattern.permute.xlu0 0
        %811 = vperm.xlu0 %810, %v793
        %v812 = vpop.permute.xlu0 %811
        %815 = vset.pattern.permute.xlu0 0
        %816 = vperm.xlu0 %815, %v794
        %v817 = vpop.permute.xlu0 %816
        %820 = vset.pattern.permute.xlu0 0
        %821 = vperm.xlu0 %820, %v795
        %v822 = vpop.permute.xlu0 %821
        %825 = vset.pattern.permute.xlu0 0
        %826 = vperm.xlu0 %825, %v796
        %v827 = vpop.permute.xlu0 %826
        %830 = vset.pattern.permute.xlu0 0
        %831 = vperm.xlu0 %830, %v797
        %v832 = vpop.permute.xlu0 %831
        %835 = vset.pattern.permute.xlu0 0
        %836 = vperm.xlu0 %835, %v798
        %v837 = vpop.permute.xlu0 %836
        %v839 = vmul.f32 %v759, %v802
        %v840 = vmul.f32 %v760, %v802
        %v841 = vmul.f32 %v761, %v802
        %v842 = vmul.f32 %v762, %v802
        %v843 = vmul.f32 %v763, %v807
        %v844 = vmul.f32 %v764, %v807
        %v845 = vmul.f32 %v765, %v807
        %v846 = vmul.f32 %v766, %v807
        %v847 = vmul.f32 %v767, %v812
        %v848 = vmul.f32 %v768, %v812
        %v849 = vmul.f32 %v769, %v812
        %v850 = vmul.f32 %v770, %v812
        %v851 = vmul.f32 %v771, %v817
        %v852 = vmul.f32 %v772, %v817
        %v853 = vmul.f32 %v773, %v817
        %v854 = vmul.f32 %v774, %v817
        %v855 = vmul.f32 %v775, %v822
        %v856 = vmul.f32 %v776, %v822
        %v857 = vmul.f32 %v777, %v822
        %v858 = vmul.f32 %v778, %v822
        %v859 = vmul.f32 %v779, %v827
        %v860 = vmul.f32 %v780, %v827
        %v861 = vmul.f32 %v781, %v827
        %v862 = vmul.f32 %v782, %v827
        %v863 = vmul.f32 %v783, %v832
        %v864 = vmul.f32 %v784, %v832
        %v865 = vmul.f32 %v785, %v832
        %v866 = vmul.f32 %v786, %v832
        %v867 = vmul.f32 %v787, %v837
        %v868 = vmul.f32 %v788, %v837
        %v869 = vmul.f32 %v789, %v837
        %v870 = vmul.f32 %v790, %v837
        %v871 = vadd.f32 %v839, %v843
        %v872 = vadd.f32 %v871, %v847
        %v873 = vadd.f32 %v872, %v851
        %v874 = vadd.f32 %v873, %v855
        %v875 = vadd.f32 %v874, %v859
        %v876 = vadd.f32 %v875, %v863
        %v877 = vadd.f32 %v876, %v867
        %v878 = vrot.slane %v877, 4
        %v879 = vadd.f32 %v877, %v878
        %v880 = vrot.slane %v879, 2
        %v881 = vadd.f32 %v879, %v880
        %v882 = vrot.slane %v881, 1
        %v883 = vadd.f32 %v881, %v882
        %v884 = vadd.f32 %v840, %v844
        %v885 = vadd.f32 %v884, %v848
        %v886 = vadd.f32 %v885, %v852
        %v887 = vadd.f32 %v886, %v856
        %v888 = vadd.f32 %v887, %v860
        %v889 = vadd.f32 %v888, %v864
        %v890 = vadd.f32 %v889, %v868
        %v891 = vrot.slane %v890, 4
        %v892 = vadd.f32 %v890, %v891
        %v893 = vrot.slane %v892, 2
        %v894 = vadd.f32 %v892, %v893
        %v895 = vrot.slane %v894, 1
        %v896 = vadd.f32 %v894, %v895
        %v897 = vadd.f32 %v841, %v845
        %v898 = vadd.f32 %v897, %v849
        %v899 = vadd.f32 %v898, %v853
        %v900 = vadd.f32 %v899, %v857
        %v901 = vadd.f32 %v900, %v861
        %v902 = vadd.f32 %v901, %v865
        %v903 = vadd.f32 %v902, %v869
        %v904 = vrot.slane %v903, 4
        %v905 = vadd.f32 %v903, %v904
        %v906 = vrot.slane %v905, 2
        %v907 = vadd.f32 %v905, %v906
        %v908 = vrot.slane %v907, 1
        %v909 = vadd.f32 %v907, %v908
        %v910 = vadd.f32 %v842, %v846
        %v911 = vadd.f32 %v910, %v850
        %v912 = vadd.f32 %v911, %v854
        %v913 = vadd.f32 %v912, %v858
        %v914 = vadd.f32 %v913, %v862
        %v915 = vadd.f32 %v914, %v866
        %v916 = vadd.f32 %v915, %v870
        %v917 = vrot.slane %v916, 4
        %v918 = vadd.f32 %v916, %v917
        %v919 = vrot.slane %v918, 2
        %v920 = vadd.f32 %v918, %v919
        %v921 = vrot.slane %v920, 1
        %v922 = vadd.f32 %v920, %v921
        %v927 = vcombine.low %v883, %v896
        %v928 = vcombine.low %v909, %v922
        %v930 = vunpack.c.l.s4 1966171168
        %v931 = vunpack.c.0.s8 %v930
        %v932 = vlaneseq
        %v933 = vshrl.u32 %v932, 7
        %v934 = vsub.s32 %v931, %v933
        %v935 = vrot.slane %v927, %v934
        %v937 = vunpack.c.l.s4 1966171168
        %v938 = vunpack.c.0.s8 %v937
        %v939 = vlaneseq
        %v940 = vshrl.u32 %v939, 7
        %v941 = vsub.s32 %v938, %v940
        %v942 = vrot.slane %v928, %v941
        %v943 = vcombine.low %v935, %v942
        %v945 = vunpack.c.l.s4 1966171168
        %v946 = vunpack.c.0.s8 %v945
        %v947 = vlaneseq
        %v948 = vshrl.u32 %v947, 7
        %v949 = vsub.s32 %v946, %v948
        %v950 = vrot.slane %v943, %v949
        %v952 = vlaneseq
        %vm953 = vcmp.ge.s32.totalorder %v952, 0
        %vm954 = vcmp.lt.s32.totalorder %v952, 512
        %vm955 = vmand %vm953, %vm954
        %956 = vst.msk [vmem:[%s230] sm:$0xf] %vm955, %v950
        %s957 = smul.u32 4, %s15
        %p958 = scmp.lt.s32.totalorder %s957, 7
        %s959 = scalar_select %p958, %s957, 7
        %s960 = scalar_lea.vmem %s4, %s959
        // Predicated region
        $region60: #{sdf_network_forward.1} parent=54 // pred_check
          %p961 = pneg %p122
        $region61: #{sdf_network_forward.1} parent=54 // pred_check_branch
          %963 = sbr.rel (%p961) target = $region63
        $region62: #{sdf_network_forward.1} parent=54 // pred_region
          %s964 = smul.u32 4, %s15
        $region63: #{sdf_network_forward.1} parent=54 // pred_fallthru
          _
      $region55: #{sdf_network_forward.1} parent=5 // pred_fallthru
        _
      %p965 = scmp.le.s32.totalorder 2, %s10
      // Predicated region
      $region64: #{sdf_network_forward.1} parent=5 // pred_check
        %p966 = pneg %p965
      $region65: #{sdf_network_forward.1} parent=5 // pred_check_branch
        %968 = sbr.rel (%p966) target = $region67
      $region66: #{sdf_network_forward.1} parent=5 // pred_region
        %s969 = ssub.s32 %s10, 2
        // Predicated region
        $region68: #{sdf_network_forward.1} parent=66 // pred_check
          %p970 = pneg %p128
        $region69: #{sdf_network_forward.1} parent=66 // pred_check_branch
          %972 = sbr.rel (%p970) target = $region71
        $region70: #{sdf_network_forward.1} parent=66 // pred_region
          %s973 = smul.u32 4, %s16
          %p974 = scmp.lt.s32.totalorder %s973, 7
          %s975 = scalar_select %p974, %s973, 7
          %s976 = scalar_lea.vmem %s4, %s975
        $region71: #{sdf_network_forward.1} parent=66 // pred_fallthru
          _
      $region67: #{sdf_network_forward.1} parent=5 // pred_fallthru
        _
    $region6: #{sdf_network_forward.1} parent=1 // loop_footer
      %s14 = sadd.s32 1, %s10
    $region7: #{sdf_network_forward.1} parent=1 // loop_footer_branch
      %9 = sbr.rel target = $region3
    $region8: #{sdf_network_forward.1} parent=1 // loop_exit
      _

</llo_original>
